<compile_context>
chip_gen: v6e
topology: v6e:2x2x1
jax: 0.10.0
libtpu: 0.0.40
codegen_flags: <defaults>
</compile_context>

<pallas_src>
import functools

import jax
import jax.numpy as jnp
from jax.experimental import pallas as pl
from jax.experimental.pallas import tpu as pltpu


# ----------------------------------------------------------------------------
# Pallas kernel: trunk MLP over the domain points + folded DeepONet combine.
# Activations are (h, tile_n): features on sublanes, points on lanes.
# ----------------------------------------------------------------------------
def _trunk_kernel(n_layers, xy_ref, w_in_ref, b_in_ref, w_hid_ref, b_hid_ref,
                  w_fin_ref, b_fin_ref, w_eff_ref, b_eff_ref, out_ref):
    cdt = w_hid_ref.dtype                       # matmul compute dtype (bf16/f32)

    x = xy_ref[0:1, :]                          # (1, tile_n) f32
    y = xy_ref[1:2, :]                          # (1, tile_n) f32
    w_in = w_in_ref[...]                        # (h, 2)      f32

    # Layer 0 has K == 2: two VPU FMAs instead of a degenerate MXU matmul.
    t = w_in[:, 0:1] * x + w_in[:, 1:2] * y + b_in_ref[...]     # (h, tile_n) f32

    # Hidden tanh layers + final linear of hid_layers_trunk (all on the MXU,
    # bf16 operands, f32 accumulation; bias add and tanh stay in f32).
    for i in range(n_layers):
        t = jnp.tanh(
            jnp.dot(w_hid_ref[i], t.astype(cdt),
                    preferred_element_type=jnp.float32) + b_hid_ref[i])
    t = jnp.dot(w_fin_ref[...], t.astype(cdt),
                preferred_element_type=jnp.float32) + b_fin_ref[...]

    # Folded out_layer_trunk + DeepONet combination:
    #   sum_j (t W_out^T + b_out)_j * branch_j  ==  w_eff^T @ t + b_eff
    out_ref[...] = (jnp.dot(w_eff_ref[...], t.astype(cdt),
                            preferred_element_type=jnp.float32)
                    + b_eff_ref[...]).astype(out_ref.dtype)


def _full_spec(shape):
    # Whole-array block with a constant block index: fetched once, DMA skipped
    # on subsequent grid steps because the block index never changes.
    return pl.BlockSpec(shape, lambda *_: (0,) * len(shape))


def _run_trunk(pt, xy_t, w_eff_t, b_eff, n_layers, tile_n, compute_dtype):
    assert tile_n % 128 == 0, "tile_n must be a multiple of 128"
    n = xy_t.shape[1]
    tile = min(tile_n, pl.cdiv(n, 128) * 128)       # don't over-tile tiny N
    n_pad = pl.cdiv(n, tile) * tile
    if n_pad != n:
        xy_t = jnp.pad(xy_t, ((0, 0), (0, n_pad - n)))
    grid = (n_pad // tile,)

    # bf16 matmul weights (halves weight DMA bytes, native on v6e/v7x MXU).
    w_hid = pt["w_hid"].astype(compute_dtype)
    w_fin = pt["w_fin"].astype(compute_dtype)
    w_eff = w_eff_t.astype(compute_dtype)

    out = pl.pallas_call(
        functools.partial(_trunk_kernel, n_layers),
        out_shape=jax.ShapeDtypeStruct((1, n_pad), jnp.float32),
        grid=grid,
        in_specs=[
            pl.BlockSpec((2, tile), lambda i: (0, i)),       # xy (2, N)
            _full_spec(pt["w_in"].shape), _full_spec(pt["b_in"].shape),
            _full_spec(w_hid.shape), _full_spec(pt["b_hid"].shape),
            _full_spec(w_fin.shape), _full_spec(pt["b_fin"].shape),
            _full_spec(w_eff.shape), _full_spec(b_eff.shape),
        ],
        out_specs=pl.BlockSpec((1, tile), lambda i: (0, i)),  # lane-dense store
        compiler_params=pltpu.CompilerParams(
            dimension_semantics=("parallel",)),
    )(xy_t, pt["w_in"], pt["b_in"], w_hid, pt["b_hid"],
      w_fin, pt["b_fin"], w_eff, b_eff)

    return out[0, :n].reshape(n, 1)


# ----------------------------------------------------------------------------
# Branch MLP (one row of work) in plain JAX, column layout: t = W @ x + b.
# ----------------------------------------------------------------------------
def _mlp_col(p, x_col, n_layers):
    t = p["w_in"] @ x_col + p["b_in"]
    for i in range(n_layers):
        t = jnp.tanh(p["w_hid"][i] @ t + p["b_hid"][i])
    t = p["w_fin"] @ t + p["b_fin"]
    return p["w_out"] @ t + p["b_out"]


# ----------------------------------------------------------------------------
# Forward pass (semantics of DeepONet2D_DBCtoSol.forward)
# ----------------------------------------------------------------------------
def deeponet_forward(params, domain_points, boundary_points, boundary_function,
                     n_layers_trunk, n_layers_branch, tile_n=512,
                     compute_dtype=jnp.bfloat16):
    # trunk input: torch.cat(domainPoints, dim=1) -> (N, 2); transposed once so
    # the kernel sees a lane-dense (2, N) slab.
    xy_t = jnp.concatenate(domain_points, axis=1).astype(jnp.float32).T    # (2, N)

    # boundaryFunction(boundaryPoints) -> branch MLP -> fold into trunk output
    # layer (all microseconds of plain-JAX work; kept outside Pallas).
    # TODO(synk): boundary_function is an arbitrary Python callable; it stays in
    # plain JAX rather than being compiled into the Pallas kernel.
    bv_col = boundary_function(boundary_points).reshape(-1, 1).astype(jnp.float32)
    br = _mlp_col(params["branch"], bv_col, n_layers_branch)               # (nmax, 1)

    pt = params["trunk"]
    w_eff_t = br.T @ pt["w_out"]                                           # (1, h_trunk)
    b_eff = br.T @ pt["b_out"]                                             # (1, 1)

    return _run_trunk(pt, xy_t, w_eff_t, b_eff, n_layers_trunk, tile_n,
                      compute_dtype)


# ----------------------------------------------------------------------------
# Deterministic parameter init (PyTorch nn.Linear default: U(-1/sqrt(fan_in), .))
# Weights stored in PyTorch layout (out_features, in_features); biases (out, 1).
# ----------------------------------------------------------------------------
def _init_linear(key, fan_in, fan_out):
    kw, kb = jax.random.split(key)
    bound = float(1.0 / (fan_in ** 0.5))
    w = jax.random.uniform(kw, (fan_out, fan_in), jnp.float32, -bound, bound)
    b = jax.random.uniform(kb, (fan_out, 1), jnp.float32, -bound, bound)
    return w, b


def _init_stack(key, n_layers, h):
    ws, bs = [], []
    for k in jax.random.split(key, n_layers):
        w, b = _init_linear(k, h, h)
        ws.append(w)
        bs.append(b)
    return jnp.stack(ws, 0), jnp.stack(bs, 0)   # (L, h, h), (L, h, 1)


def init_params(key, n_hidden_trunk, n_layers_trunk,
                n_hidden_branch, n_layers_branch, n_boundary_points):
    nmax = max(n_hidden_branch, n_hidden_trunk)
    keys = jax.random.split(key, 8)

    tw_in, tb_in = _init_linear(keys[0], 2, n_hidden_trunk)
    tw_hid, tb_hid = _init_stack(keys[1], n_layers_trunk, n_hidden_trunk)
    tw_fin, tb_fin = _init_linear(keys[2], n_hidden_trunk, n_hidden_trunk)
    tw_out, tb_out = _init_linear(keys[3], n_hidden_trunk, nmax)

    bw_in, bb_in = _init_linear(keys[4], n_boundary_points, n_hidden_branch)
    bw_hid, bb_hid = _init_stack(keys[5], n_layers_branch, n_hidden_branch)
    bw_fin, bb_fin = _init_linear(keys[6], n_hidden_branch, n_hidden_branch)
    bw_out, bb_out = _init_linear(keys[7], n_hidden_branch, nmax)

    return {
        "trunk": dict(w_in=tw_in, b_in=tb_in, w_hid=tw_hid, b_hid=tb_hid,
                      w_fin=tw_fin, b_fin=tb_fin, w_out=tw_out, b_out=tb_out),
        "branch": dict(w_in=bw_in, b_in=bb_in, w_hid=bw_hid, b_hid=bb_hid,
                       w_fin=bw_fin, b_fin=bb_fin, w_out=bw_out, b_out=bb_out),
    }


# Pure-JAX f32 reference that mirrors the PyTorch forward exactly (row layout).
def ref_forward(params, domain_points, boundary_points, boundary_function,
                n_layers_trunk, n_layers_branch):
    def row_mlp(p, x, n_layers):
        t = x @ p["w_in"].T + p["b_in"].T
        for i in range(n_layers):
            t = jnp.tanh(t @ p["w_hid"][i].T + p["b_hid"][i].T)
        t = t @ p["w_fin"].T + p["b_fin"].T
        return t @ p["w_out"].T + p["b_out"].T

    xy = jnp.concatenate(domain_points, axis=1).astype(jnp.float32)
    trunk = row_mlp(params["trunk"], xy, n_layers_trunk)
    bv = boundary_function(boundary_points).reshape(1, -1).astype(jnp.float32)
    branch = row_mlp(params["branch"], bv, n_layers_branch)
    return jnp.sum(trunk * branch, axis=1, keepdims=True)


if __name__ == "__main__":
    key = jax.random.PRNGKey(0)
    n_hidden_trunk, n_layers_trunk = 32, 2
    n_hidden_branch, n_layers_branch = 32, 2
    n_bp = 64            # number of boundary points
    n_points = 1024      # number of domain points (e.g. a 32x32 evaluation grid)
    tile_n = 512         # 2 grid steps -> both v7x TensorCores get work

    k_bx, k_by, k_dx, k_dy, k_param = jax.random.split(key, 5)
    boundary_points = [jax.random.uniform(k_bx, (n_bp, 1), jnp.float32),
                       jax.random.uniform(k_by, (n_bp, 1), jnp.float32)]
    domain_points = [jax.random.uniform(k_dx, (n_points, 1), jnp.float32),
                     jax.random.uniform(k_dy, (n_points, 1), jnp.float32)]

    def boundary_function(pts):
        # Dirichlet boundary data g(x, y) evaluated at the boundary points.
        return jnp.sin(jnp.pi * pts[0]) * jnp.cos(jnp.pi * pts[1])

    params = init_params(k_param, n_hidden_trunk, n_layers_trunk,
                         n_hidden_branch, n_layers_branch, n_bp)

    out = deeponet_forward(params, domain_points, boundary_points,
                           boundary_function, n_layers_trunk, n_layers_branch,
                           tile_n=tile_n, compute_dtype=jnp.bfloat16)
    out = jax.block_until_ready(out)

    ref = ref_forward(params, domain_points, boundary_points, boundary_function,
                      n_layers_trunk, n_layers_branch)

    assert out.shape == (n_points, 1)
    assert bool(jnp.all(jnp.isfinite(out)))
    # bf16 matmul operands with f32 accumulation -> compare loosely vs f32 ref.
    assert bool(jnp.allclose(out, ref, rtol=2e-2, atol=2e-2)), (
        float(jnp.max(jnp.abs(out - ref))))
    print("KERNEL_OK")
</pallas_src>

<mosaic_0001>
module attributes {stable_mosaic.version = 11 : i64} {
  func.func @_trunk_kernel(%arg0: i32, %arg1: memref<2x512xf32, #tpu.memory_space<vmem>>, %arg2: memref<32x2xf32, #tpu.memory_space<vmem>>, %arg3: memref<32x1xf32, #tpu.memory_space<vmem>>, %arg4: memref<2x32x32xbf16, #tpu.memory_space<vmem>>, %arg5: memref<2x32x1xf32, #tpu.memory_space<vmem>>, %arg6: memref<32x32xbf16, #tpu.memory_space<vmem>>, %arg7: memref<32x1xf32, #tpu.memory_space<vmem>>, %arg8: memref<1x32xbf16, #tpu.memory_space<vmem>>, %arg9: memref<1x1xf32, #tpu.memory_space<vmem>>, %arg10: memref<1x512xf32, #tpu.memory_space<vmem>>) attributes {dimension_semantics = [#tpu.dimension_semantics<parallel>], iteration_bounds = array<i64: 2>, scalar_prefetch = 0 : i64, scratch_operands = 0 : i64, tpu.core_type = #tpu.core_type<tc>, window_params = [{transform_indices = @transform_0, window_bounds = array<i64: 2, 512>}, {pipeline_mode = #tpu.pipeline_mode<synchronous>, transform_indices = @transform_1, window_bounds = array<i64: 32, 2>}, {pipeline_mode = #tpu.pipeline_mode<synchronous>, transform_indices = @transform_2, window_bounds = array<i64: 32, 1>}, {pipeline_mode = #tpu.pipeline_mode<synchronous>, transform_indices = @transform_3, window_bounds = array<i64: 2, 32, 32>}, {pipeline_mode = #tpu.pipeline_mode<synchronous>, transform_indices = @transform_4, window_bounds = array<i64: 2, 32, 1>}, {pipeline_mode = #tpu.pipeline_mode<synchronous>, transform_indices = @transform_5, window_bounds = array<i64: 32, 32>}, {pipeline_mode = #tpu.pipeline_mode<synchronous>, transform_indices = @transform_6, window_bounds = array<i64: 32, 1>}, {pipeline_mode = #tpu.pipeline_mode<synchronous>, transform_indices = @transform_7, window_bounds = array<i64: 1, 32>}, {pipeline_mode = #tpu.pipeline_mode<synchronous>, transform_indices = @transform_8, window_bounds = array<i64: 1, 1>}, {transform_indices = @transform_9, window_bounds = array<i64: 1, 512>}]} {
    %c0 = arith.constant 0 : index
    %c0_0 = arith.constant 0 : index
    %0 = vector.load %arg1[%c0, %c0_0] : memref<2x512xf32, #tpu.memory_space<vmem>>, vector<1x512xf32>
    %c1 = arith.constant 1 : index
    %c0_1 = arith.constant 0 : index
    %1 = vector.load %arg1[%c1, %c0_1] : memref<2x512xf32, #tpu.memory_space<vmem>>, vector<1x512xf32>
    %c0_2 = arith.constant 0 : index
    %c0_3 = arith.constant 0 : index
    %2 = vector.load %arg2[%c0_2, %c0_3] : memref<32x2xf32, #tpu.memory_space<vmem>>, vector<32x2xf32>
    %3 = vector.extract_strided_slice %2 {offsets = [0, 0], sizes = [32, 1], strides = [1, 1]} : vector<32x2xf32> to vector<32x1xf32>
    %4 = vector.broadcast %3 : vector<32x1xf32> to vector<32x512xf32>
    %5 = vector.broadcast %0 : vector<1x512xf32> to vector<32x512xf32>
    %6 = arith.mulf %4, %5 : vector<32x512xf32>
    %7 = vector.extract_strided_slice %2 {offsets = [0, 1], sizes = [32, 1], strides = [1, 1]} : vector<32x2xf32> to vector<32x1xf32>
    %8 = vector.broadcast %7 : vector<32x1xf32> to vector<32x512xf32>
    %9 = vector.broadcast %1 : vector<1x512xf32> to vector<32x512xf32>
    %10 = arith.mulf %8, %9 : vector<32x512xf32>
    %11 = arith.addf %6, %10 : vector<32x512xf32>
    %c0_4 = arith.constant 0 : index
    %c0_5 = arith.constant 0 : index
    %12 = vector.load %arg3[%c0_4, %c0_5] : memref<32x1xf32, #tpu.memory_space<vmem>>, vector<32x1xf32>
    %13 = vector.broadcast %12 : vector<32x1xf32> to vector<32x512xf32>
    %14 = arith.addf %11, %13 : vector<32x512xf32>
    %c0_6 = arith.constant 0 : index
    %c0_7 = arith.constant 0 : index
    %c0_8 = arith.constant 0 : index
    %15 = vector.load %arg4[%c0_6, %c0_7, %c0_8] : memref<2x32x32xbf16, #tpu.memory_space<vmem>>, vector<1x32x32xbf16>
    %16 = vector.shape_cast %15 : vector<1x32x32xbf16> to vector<32x32xbf16>
    %17 = arith.truncf %14 : vector<32x512xf32> to vector<32x512xbf16>
    %cst = arith.constant dense<0.000000e+00> : vector<32x512xf32>
    %18 = tpu.matmul %16, %17, %cst {dimension_numbers = #tpu.dot_dimension_numbers<[1], [0], [0], [1], [0, 0, 1, 1], [], []>} : vector<32x32xbf16>, vector<32x512xbf16>, vector<32x512xf32> -> vector<32x512xf32>
    %c0_9 = arith.constant 0 : index
    %c0_10 = arith.constant 0 : index
    %c0_11 = arith.constant 0 : index
    %19 = vector.load %arg5[%c0_9, %c0_10, %c0_11] : memref<2x32x1xf32, #tpu.memory_space<vmem>>, vector<1x32x1xf32>
    %20 = vector.shape_cast %19 : vector<1x32x1xf32> to vector<32x1xf32>
    %21 = vector.broadcast %20 : vector<32x1xf32> to vector<32x512xf32>
    %22 = arith.addf %18, %21 : vector<32x512xf32>
    %23 = math.tanh %22 : vector<32x512xf32>
    %c1_12 = arith.constant 1 : index
    %c0_13 = arith.constant 0 : index
    %c0_14 = arith.constant 0 : index
    %24 = vector.load %arg4[%c1_12, %c0_13, %c0_14] : memref<2x32x32xbf16, #tpu.memory_space<vmem>>, vector<1x32x32xbf16>
    %25 = vector.shape_cast %24 : vector<1x32x32xbf16> to vector<32x32xbf16>
    %26 = arith.truncf %23 : vector<32x512xf32> to vector<32x512xbf16>
    %cst_15 = arith.constant dense<0.000000e+00> : vector<32x512xf32>
    %27 = tpu.matmul %25, %26, %cst_15 {dimension_numbers = #tpu.dot_dimension_numbers<[1], [0], [0], [1], [0, 0, 1, 1], [], []>} : vector<32x32xbf16>, vector<32x512xbf16>, vector<32x512xf32> -> vector<32x512xf32>
    %c1_16 = arith.constant 1 : index
    %c0_17 = arith.constant 0 : index
    %c0_18 = arith.constant 0 : index
    %28 = vector.load %arg5[%c1_16, %c0_17, %c0_18] : memref<2x32x1xf32, #tpu.memory_space<vmem>>, vector<1x32x1xf32>
    %29 = vector.shape_cast %28 : vector<1x32x1xf32> to vector<32x1xf32>
    %30 = vector.broadcast %29 : vector<32x1xf32> to vector<32x512xf32>
    %31 = arith.addf %27, %30 : vector<32x512xf32>
    %32 = math.tanh %31 : vector<32x512xf32>
    %c0_19 = arith.constant 0 : index
    %c0_20 = arith.constant 0 : index
    %33 = vector.load %arg6[%c0_19, %c0_20] : memref<32x32xbf16, #tpu.memory_space<vmem>>, vector<32x32xbf16>
    %34 = arith.truncf %32 : vector<32x512xf32> to vector<32x512xbf16>
    %cst_21 = arith.constant dense<0.000000e+00> : vector<32x512xf32>
    %35 = tpu.matmul %33, %34, %cst_21 {dimension_numbers = #tpu.dot_dimension_numbers<[1], [0], [0], [1], [0, 0, 1, 1], [], []>} : vector<32x32xbf16>, vector<32x512xbf16>, vector<32x512xf32> -> vector<32x512xf32>
    %c0_22 = arith.constant 0 : index
    %c0_23 = arith.constant 0 : index
    %36 = vector.load %arg7[%c0_22, %c0_23] : memref<32x1xf32, #tpu.memory_space<vmem>>, vector<32x1xf32>
    %37 = vector.broadcast %36 : vector<32x1xf32> to vector<32x512xf32>
    %38 = arith.addf %35, %37 : vector<32x512xf32>
    %c0_24 = arith.constant 0 : index
    %c0_25 = arith.constant 0 : index
    %39 = vector.load %arg8[%c0_24, %c0_25] : memref<1x32xbf16, #tpu.memory_space<vmem>>, vector<1x32xbf16>
    %40 = arith.truncf %38 : vector<32x512xf32> to vector<32x512xbf16>
    %cst_26 = arith.constant dense<0.000000e+00> : vector<1x512xf32>
    %41 = tpu.matmul %39, %40, %cst_26 {dimension_numbers = #tpu.dot_dimension_numbers<[1], [0], [0], [1], [0, 0, 1, 1], [], []>} : vector<1x32xbf16>, vector<32x512xbf16>, vector<1x512xf32> -> vector<1x512xf32>
    %c0_27 = arith.constant 0 : index
    %c0_28 = arith.constant 0 : index
    %42 = vector.load %arg9[%c0_27, %c0_28] : memref<1x1xf32, #tpu.memory_space<vmem>>, vector<1x1xf32>
    %43 = vector.broadcast %42 : vector<1x1xf32> to vector<1x512xf32>
    %44 = arith.addf %41, %43 : vector<1x512xf32>
    %c0_29 = arith.constant 0 : index
    %c0_30 = arith.constant 0 : index
    %45 = vector.load %arg10[%c0_29, %c0_30] : memref<1x512xf32, #tpu.memory_space<vmem>>, vector<1x512xf32>
    tpu.vector_store %arg10[%c0_29, %c0_30], %44 {strides = array<i32>} : memref<1x512xf32, #tpu.memory_space<vmem>>, vector<1x512xf32>,
    return
  }
  func.func @transform_0(%arg0: i32) -> (i32, i32) {
    %c0_i32 = arith.constant 0 : i32
    %c0_i32_0 = arith.constant 0 : i32
    return %c0_i32, %arg0 : i32, i32
  }
  func.func @transform_1(%arg0: i32) -> (i32, i32) {
    %c0_i32 = arith.constant 0 : i32
    %c0_i32_0 = arith.constant 0 : i32
    %c0_i32_1 = arith.constant 0 : i32
    return %c0_i32, %c0_i32_0 : i32, i32
  }
  func.func @transform_2(%arg0: i32) -> (i32, i32) {
    %c0_i32 = arith.constant 0 : i32
    %c0_i32_0 = arith.constant 0 : i32
    %c0_i32_1 = arith.constant 0 : i32
    return %c0_i32, %c0_i32_0 : i32, i32
  }
  func.func @transform_3(%arg0: i32) -> (i32, i32, i32) {
    %c0_i32 = arith.constant 0 : i32
    %c0_i32_0 = arith.constant 0 : i32
    %c0_i32_1 = arith.constant 0 : i32
    %c0_i32_2 = arith.constant 0 : i32
    return %c0_i32, %c0_i32_0, %c0_i32_1 : i32, i32, i32
  }
  func.func @transform_4(%arg0: i32) -> (i32, i32, i32) {
    %c0_i32 = arith.constant 0 : i32
    %c0_i32_0 = arith.constant 0 : i32
    %c0_i32_1 = arith.constant 0 : i32
    %c0_i32_2 = arith.constant 0 : i32
    return %c0_i32, %c0_i32_0, %c0_i32_1 : i32, i32, i32
  }
  func.func @transform_5(%arg0: i32) -> (i32, i32) {
    %c0_i32 = arith.constant 0 : i32
    %c0_i32_0 = arith.constant 0 : i32
    %c0_i32_1 = arith.constant 0 : i32
    return %c0_i32, %c0_i32_0 : i32, i32
  }
  func.func @transform_6(%arg0: i32) -> (i32, i32) {
    %c0_i32 = arith.constant 0 : i32
    %c0_i32_0 = arith.constant 0 : i32
    %c0_i32_1 = arith.constant 0 : i32
    return %c0_i32, %c0_i32_0 : i32, i32
  }
  func.func @transform_7(%arg0: i32) -> (i32, i32) {
    %c0_i32 = arith.constant 0 : i32
    %c0_i32_0 = arith.constant 0 : i32
    %c0_i32_1 = arith.constant 0 : i32
    return %c0_i32, %c0_i32_0 : i32, i32
  }
  func.func @transform_8(%arg0: i32) -> (i32, i32) {
    %c0_i32 = arith.constant 0 : i32
    %c0_i32_0 = arith.constant 0 : i32
    %c0_i32_1 = arith.constant 0 : i32
    return %c0_i32, %c0_i32_0 : i32, i32
  }
  func.func @transform_9(%arg0: i32) -> (i32, i32) {
    %c0_i32 = arith.constant 0 : i32
    %c0_i32_0 = arith.constant 0 : i32
    return %c0_i32, %arg0 : i32, i32
  }
}

</mosaic_0001>

<llo_original>
// kernel: tpu_custom_call.1
$region0: #{tpu_custom_call.1}
  #allocation0 [shape = 'u32[]', space=smem, size = 0x4, offset = 0x4, fixed_abs, tag = 'smem constant byte address 0x4 - core index']
  #allocation1 [shape = 'u32[144,128]{1,0:T(1,128)}', space=vmem, size = 0x12000, scoped, tag = 'internal scratch']
  #allocation2 [shape = 'f32[1,1]{1,0:T(1,128)S(1)}', space=vmem, size = 0x200, scoped, tag = 'scoped memory for tpu_custom_call.1']
  %s0 = inlined_call_operand.vmem [shape: f32[2,1024], index: 0, kind: input, shape index: {}]
  %s1 = inlined_call_operand.vmem [shape: f32[32,2], index: 1, kind: input, shape index: {}]
  %s2 = inlined_call_operand.vmem [shape: f32[32,1], index: 2, kind: input, shape index: {}]
  %s3 = inlined_call_operand.vmem [shape: bf16[2,32,32], index: 3, kind: input, shape index: {}]
  %s4 = inlined_call_operand.vmem [shape: f32[2,32,1], index: 4, kind: input, shape index: {}]
  %s5 = inlined_call_operand.vmem [shape: bf16[32,32], index: 5, kind: input, shape index: {}]
  %s6 = inlined_call_operand.vmem [shape: f32[32,1], index: 6, kind: input, shape index: {}]
  %s7 = inlined_call_operand.vmem [shape: bf16[1,32], index: 7, kind: input, shape index: {}]
  %s8 = inlined_call_operand.<no memory space> [shape: f32[1,1], index: 8, kind: input, shape index: {}]
  %s9 = inlined_call_operand.hbm [shape: f32[1,1024], index: 9, kind: output, shape index: {}]
  %s10 = sld [smem:[#allocation0]]
  $region69: #{tpu_custom_call.1} parent=0
    _
  %s12 = ssub.s32 1, %s10
  %s13 = scalar_select 0, %s12, %s10
  %v14 = vstv %s8
  %15 = vst [vmem:[#allocation2] sm:$0x1] %v14
  $region1: #{tpu_custom_call.1} parent=0
    #allocation3 [shape = 'u8[4096]{0}', space=vmem, size = 0x1000, scoped, tag = 'output window, operand 0']
    #allocation4 [shape = 's32[2]{0}', space=sflag, size = 0x8, scoped, tag = 'scoped memory for tpu_custom_call.1']
    %16 = vsyncpa [#allocation4], 0
    %s17 = scalar_lea.sflag [#allocation4], 1
    %18 = vsyncpa %s17, 0
    loop: start=0, step=1, limit=4
    $region2: #{tpu_custom_call.1} parent=1 // loop_pre_header
      _
    $region3: #{tpu_custom_call.1} parent=1 // loop_header
      %s20 = sphi 0, %s24
      %p21 = scmp.ge.s32.totalorder %s20, 4
      %s30 = sphi 0, %s32
      %s33 = sphi 0, %s30
      %s34 = sphi 0, %s33
      %s50 = sphi 0, %s34
      %s54 = sphi 0, %s54
      %s56 = sphi 0, %s54
      %s57 = sphi 0, %s56
      %s71 = sphi 0, %s57
      %s75 = sphi 0, %s75
      %s77 = sphi 0, %s75
      %s78 = sphi 0, %s77
      %s92 = sphi 0, %s78
      %s96 = sphi 0, %s96
      %s98 = sphi 0, %s96
      %s99 = sphi 0, %s98
      %s113 = sphi 0, %s99
      %s117 = sphi 0, %s117
      %s119 = sphi 0, %s117
      %s120 = sphi 0, %s119
      %s134 = sphi 0, %s120
      %s138 = sphi 0, %s138
      %s140 = sphi 0, %s138
      %s141 = sphi 0, %s140
      %s155 = sphi 0, %s141
      %s159 = sphi 0, %s159
      %s161 = sphi 0, %s159
      %s162 = sphi 0, %s161
      %s176 = sphi 0, %s162
      %s180 = sphi 0, %s180
      %s182 = sphi 0, %s180
      %s183 = sphi 0, %s182
      %s197 = sphi 0, %s183
      %s201 = sphi 0, %s201
      %s203 = sphi 0, %s201
      %s204 = sphi 0, %s203
      %s218 = sphi 0, %s204
      %s224 = sphi 0, %s226
      %s227 = sphi 0, %s224
      %s228 = sphi 0, %s227
      %s244 = sphi 0, %s228
    $region4: #{tpu_custom_call.1} parent=1 // loop_header_branch
      %23 = sbr.rel (%p21) target = $region8
    $region5: #{tpu_custom_call.1} parent=1 // loop_body
      %s25 = ssub.s32 %s20, 1
      %s26 = ssub.s32 %s20, 2
      %s27 = sadd.s32 %s20, 1
      %s28 = ssub.s32 %s20, %s27
      %p29 = scmp.eq.s32.totalorder %s28, 0
      %s31 = sadd.s32 %s30, 1
      %s32 = scalar_select %p29, %s30, %s31
      %p35 = pneg %p29
      %p36 = scmp.eq.s32.totalorder %s20, 1
      %p37 = por %p35, %p36
      %p38 = scmp.ne.s32.totalorder %s30, %s33
      %p39 = scmp.eq.s32.totalorder %s20, 0
      %p40 = por %p38, %p39
      %p41 = scmp.ne.s32.totalorder %s30, %s33
      %p42 = scmp.eq.s32.totalorder %s25, 1
      %p43 = por %p41, %p42
      %p44 = scmp.ne.s32.totalorder %s33, %s34
      %p45 = scmp.eq.s32.totalorder %s25, 0
      %p46 = por %p44, %p45
      %p47 = scmp.ne.s32.totalorder %s33, %s34
      %p48 = scmp.eq.s32.totalorder %s26, 1
      %p49 = por %p47, %p48
      %p51 = scmp.ne.s32.totalorder %s34, %s50
      %p52 = scmp.eq.s32.totalorder %s26, 0
      %p53 = por %p51, %p52
      %s55 = sadd.s32 %s54, 1
      %p58 = scmp.eq.s32.totalorder %s20, 1
      %p59 = scmp.ne.s32.totalorder %s54, %s56
      %p60 = scmp.eq.s32.totalorder %s20, 0
      %p61 = por %p59, %p60
      %p62 = scmp.ne.s32.totalorder %s54, %s56
      %p63 = scmp.eq.s32.totalorder %s25, 1
      %p64 = por %p62, %p63
      %p65 = scmp.ne.s32.totalorder %s56, %s57
      %p66 = scmp.eq.s32.totalorder %s25, 0
      %p67 = por %p65, %p66
      %p68 = scmp.ne.s32.totalorder %s56, %s57
      %p69 = scmp.eq.s32.totalorder %s26, 1
      %p70 = por %p68, %p69
      %p72 = scmp.ne.s32.totalorder %s57, %s71
      %p73 = scmp.eq.s32.totalorder %s26, 0
      %p74 = por %p72, %p73
      %s76 = sadd.s32 %s75, 1
      %p79 = scmp.eq.s32.totalorder %s20, 1
      %p80 = scmp.ne.s32.totalorder %s75, %s77
      %p81 = scmp.eq.s32.totalorder %s20, 0
      %p82 = por %p80, %p81
      %p83 = scmp.ne.s32.totalorder %s75, %s77
      %p84 = scmp.eq.s32.totalorder %s25, 1
      %p85 = por %p83, %p84
      %p86 = scmp.ne.s32.totalorder %s77, %s78
      %p87 = scmp.eq.s32.totalorder %s25, 0
      %p88 = por %p86, %p87
      %p89 = scmp.ne.s32.totalorder %s77, %s78
      %p90 = scmp.eq.s32.totalorder %s26, 1
      %p91 = por %p89, %p90
      %p93 = scmp.ne.s32.totalorder %s78, %s92
      %p94 = scmp.eq.s32.totalorder %s26, 0
      %p95 = por %p93, %p94
      %s97 = sadd.s32 %s96, 1
      %p100 = scmp.eq.s32.totalorder %s20, 1
      %p101 = scmp.ne.s32.totalorder %s96, %s98
      %p102 = scmp.eq.s32.totalorder %s20, 0
      %p103 = por %p101, %p102
      %p104 = scmp.ne.s32.totalorder %s96, %s98
      %p105 = scmp.eq.s32.totalorder %s25, 1
      %p106 = por %p104, %p105
      %p107 = scmp.ne.s32.totalorder %s98, %s99
      %p108 = scmp.eq.s32.totalorder %s25, 0
      %p109 = por %p107, %p108
      %p110 = scmp.ne.s32.totalorder %s98, %s99
      %p111 = scmp.eq.s32.totalorder %s26, 1
      %p112 = por %p110, %p111
      %p114 = scmp.ne.s32.totalorder %s99, %s113
      %p115 = scmp.eq.s32.totalorder %s26, 0
      %p116 = por %p114, %p115
      %s118 = sadd.s32 %s117, 1
      %p121 = scmp.eq.s32.totalorder %s20, 1
      %p122 = scmp.ne.s32.totalorder %s117, %s119
      %p123 = scmp.eq.s32.totalorder %s20, 0
      %p124 = por %p122, %p123
      %p125 = scmp.ne.s32.totalorder %s117, %s119
      %p126 = scmp.eq.s32.totalorder %s25, 1
      %p127 = por %p125, %p126
      %p128 = scmp.ne.s32.totalorder %s119, %s120
      %p129 = scmp.eq.s32.totalorder %s25, 0
      %p130 = por %p128, %p129
      %p131 = scmp.ne.s32.totalorder %s119, %s120
      %p132 = scmp.eq.s32.totalorder %s26, 1
      %p133 = por %p131, %p132
      %p135 = scmp.ne.s32.totalorder %s120, %s134
      %p136 = scmp.eq.s32.totalorder %s26, 0
      %p137 = por %p135, %p136
      %s139 = sadd.s32 %s138, 1
      %p142 = scmp.eq.s32.totalorder %s20, 1
      %p143 = scmp.ne.s32.totalorder %s138, %s140
      %p144 = scmp.eq.s32.totalorder %s20, 0
      %p145 = por %p143, %p144
      %p146 = scmp.ne.s32.totalorder %s138, %s140
      %p147 = scmp.eq.s32.totalorder %s25, 1
      %p148 = por %p146, %p147
      %p149 = scmp.ne.s32.totalorder %s140, %s141
      %p150 = scmp.eq.s32.totalorder %s25, 0
      %p151 = por %p149, %p150
      %p152 = scmp.ne.s32.totalorder %s140, %s141
      %p153 = scmp.eq.s32.totalorder %s26, 1
      %p154 = por %p152, %p153
      %p156 = scmp.ne.s32.totalorder %s141, %s155
      %p157 = scmp.eq.s32.totalorder %s26, 0
      %p158 = por %p156, %p157
      %s160 = sadd.s32 %s159, 1
      %p163 = scmp.eq.s32.totalorder %s20, 1
      %p164 = scmp.ne.s32.totalorder %s159, %s161
      %p165 = scmp.eq.s32.totalorder %s20, 0
      %p166 = por %p164, %p165
      %p167 = scmp.ne.s32.totalorder %s159, %s161
      %p168 = scmp.eq.s32.totalorder %s25, 1
      %p169 = por %p167, %p168
      %p170 = scmp.ne.s32.totalorder %s161, %s162
      %p171 = scmp.eq.s32.totalorder %s25, 0
      %p172 = por %p170, %p171
      %p173 = scmp.ne.s32.totalorder %s161, %s162
      %p174 = scmp.eq.s32.totalorder %s26, 1
      %p175 = por %p173, %p174
      %p177 = scmp.ne.s32.totalorder %s162, %s176
      %p178 = scmp.eq.s32.totalorder %s26, 0
      %p179 = por %p177, %p178
      %s181 = sadd.s32 %s180, 1
      %p184 = scmp.eq.s32.totalorder %s20, 1
      %p185 = scmp.ne.s32.totalorder %s180, %s182
      %p186 = scmp.eq.s32.totalorder %s20, 0
      %p187 = por %p185, %p186
      %p188 = scmp.ne.s32.totalorder %s180, %s182
      %p189 = scmp.eq.s32.totalorder %s25, 1
      %p190 = por %p188, %p189
      %p191 = scmp.ne.s32.totalorder %s182, %s183
      %p192 = scmp.eq.s32.totalorder %s25, 0
      %p193 = por %p191, %p192
      %p194 = scmp.ne.s32.totalorder %s182, %s183
      %p195 = scmp.eq.s32.totalorder %s26, 1
      %p196 = por %p194, %p195
      %p198 = scmp.ne.s32.totalorder %s183, %s197
      %p199 = scmp.eq.s32.totalorder %s26, 0
      %p200 = por %p198, %p199
      %s202 = sadd.s32 %s201, 1
      %p205 = scmp.eq.s32.totalorder %s20, 1
      %p206 = scmp.ne.s32.totalorder %s201, %s203
      %p207 = scmp.eq.s32.totalorder %s20, 0
      %p208 = por %p206, %p207
      %p209 = scmp.ne.s32.totalorder %s201, %s203
      %p210 = scmp.eq.s32.totalorder %s25, 1
      %p211 = por %p209, %p210
      %p212 = scmp.ne.s32.totalorder %s203, %s204
      %p213 = scmp.eq.s32.totalorder %s25, 0
      %p214 = por %p212, %p213
      %p215 = scmp.ne.s32.totalorder %s203, %s204
      %p216 = scmp.eq.s32.totalorder %s26, 1
      %p217 = por %p215, %p216
      %p219 = scmp.ne.s32.totalorder %s204, %s218
      %p220 = scmp.eq.s32.totalorder %s26, 0
      %p221 = por %p219, %p220
      %s222 = ssub.s32 %s20, %s27
      %p223 = scmp.eq.s32.totalorder %s222, 0
      %s225 = sadd.s32 %s224, 1
      %s226 = scalar_select %p223, %s224, %s225
      %p229 = pneg %p223
      %p230 = scmp.eq.s32.totalorder %s20, 1
      %p231 = por %p229, %p230
      %p232 = scmp.ne.s32.totalorder %s224, %s227
      %p233 = scmp.eq.s32.totalorder %s20, 0
      %p234 = por %p232, %p233
      %p235 = scmp.ne.s32.totalorder %s224, %s227
      %p236 = scmp.eq.s32.totalorder %s25, 1
      %p237 = por %p235, %p236
      %p238 = scmp.ne.s32.totalorder %s227, %s228
      %p239 = scmp.eq.s32.totalorder %s25, 0
      %p240 = por %p238, %p239
      %p241 = scmp.ne.s32.totalorder %s227, %s228
      %p242 = scmp.eq.s32.totalorder %s26, 1
      %p243 = por %p241, %p242
      %p245 = scmp.ne.s32.totalorder %s228, %s244
      %p246 = scmp.eq.s32.totalorder %s26, 0
      %p247 = por %p245, %p246
      %p248 = scmp.le.s32.totalorder 1, %s20
      %p249 = scmp.lt.s32.totalorder %s20, 3
      %p250 = pnand %p248, %p249
      %p251 = pneg %p250
      // Predicated region
      $region9: #{tpu_custom_call.1} parent=5 // pred_check
        _
      $region10: #{tpu_custom_call.1} parent=5 // pred_check_branch
        %253 = sbr.rel (%p250) target = $region12
      $region11: #{tpu_custom_call.1} parent=5 // pred_region
        %s254 = ssub.s32 %s20, 1
        // Predicated region
        $region13: #{tpu_custom_call.1} parent=11 // pred_check
          %p255 = pneg %p67
        $region14: #{tpu_custom_call.1} parent=11 // pred_check_branch
          %257 = sbr.rel (%p255) target = $region16
        $region15: #{tpu_custom_call.1} parent=11 // pred_region
          _
        $region16: #{tpu_custom_call.1} parent=11 // pred_fallthru
          _
        // Predicated region
        $region17: #{tpu_custom_call.1} parent=11 // pred_check
          %p258 = pneg %p88
        $region18: #{tpu_custom_call.1} parent=11 // pred_check_branch
          %260 = sbr.rel (%p258) target = $region20
        $region19: #{tpu_custom_call.1} parent=11 // pred_region
          _
        $region20: #{tpu_custom_call.1} parent=11 // pred_fallthru
          _
        // Predicated region
        $region21: #{tpu_custom_call.1} parent=11 // pred_check
          %p261 = pneg %p109
        $region22: #{tpu_custom_call.1} parent=11 // pred_check_branch
          %263 = sbr.rel (%p261) target = $region24
        $region23: #{tpu_custom_call.1} parent=11 // pred_region
          _
        $region24: #{tpu_custom_call.1} parent=11 // pred_fallthru
          _
        // Predicated region
        $region25: #{tpu_custom_call.1} parent=11 // pred_check
          %p264 = pneg %p130
        $region26: #{tpu_custom_call.1} parent=11 // pred_check_branch
          %266 = sbr.rel (%p264) target = $region28
        $region27: #{tpu_custom_call.1} parent=11 // pred_region
          _
        $region28: #{tpu_custom_call.1} parent=11 // pred_fallthru
          _
        // Predicated region
        $region29: #{tpu_custom_call.1} parent=11 // pred_check
          %p267 = pneg %p151
        $region30: #{tpu_custom_call.1} parent=11 // pred_check_branch
          %269 = sbr.rel (%p267) target = $region32
        $region31: #{tpu_custom_call.1} parent=11 // pred_region
          _
        $region32: #{tpu_custom_call.1} parent=11 // pred_fallthru
          _
        // Predicated region
        $region33: #{tpu_custom_call.1} parent=11 // pred_check
          %p270 = pneg %p172
        $region34: #{tpu_custom_call.1} parent=11 // pred_check_branch
          %272 = sbr.rel (%p270) target = $region36
        $region35: #{tpu_custom_call.1} parent=11 // pred_region
          _
        $region36: #{tpu_custom_call.1} parent=11 // pred_fallthru
          _
        // Predicated region
        $region37: #{tpu_custom_call.1} parent=11 // pred_check
          %p273 = pneg %p193
        $region38: #{tpu_custom_call.1} parent=11 // pred_check_branch
          %275 = sbr.rel (%p273) target = $region40
        $region39: #{tpu_custom_call.1} parent=11 // pred_region
          _
        $region40: #{tpu_custom_call.1} parent=11 // pred_fallthru
          _
        // Predicated region
        $region41: #{tpu_custom_call.1} parent=11 // pred_check
          %p276 = pneg %p214
        $region42: #{tpu_custom_call.1} parent=11 // pred_check_branch
          %278 = sbr.rel (%p276) target = $region44
        $region43: #{tpu_custom_call.1} parent=11 // pred_region
          _
        $region44: #{tpu_custom_call.1} parent=11 // pred_fallthru
          _
      $region12: #{tpu_custom_call.1} parent=5 // pred_fallthru
        _
      %p279 = scmp.lt.s32.totalorder %s20, 2
      // Predicated region
      $region45: #{tpu_custom_call.1} parent=5 // pred_check
        %p280 = pneg %p279
      $region46: #{tpu_custom_call.1} parent=5 // pred_check_branch
        %282 = sbr.rel (%p280) target = $region48
      $region47: #{tpu_custom_call.1} parent=5 // pred_region
        // Predicated region
        $region49: #{tpu_custom_call.1} parent=47 // pred_check
          %p283 = pneg %p40
        $region50: #{tpu_custom_call.1} parent=47 // pred_check_branch
          %285 = sbr.rel (%p283) target = $region52
        $region51: #{tpu_custom_call.1} parent=47 // pred_region
          %s286 = smul.u32 4, %s20
          %p287 = scmp.lt.s32.totalorder %s286, 7
          %s288 = scalar_select %p287, %s286, 7
          %s289 = smul.addr %s288, 2
          %s290 = scalar_lea.vmem %s0, %s289
          %s291 = smul.u32 4, %s20
        $region52: #{tpu_custom_call.1} parent=47 // pred_fallthru
          _
      $region48: #{tpu_custom_call.1} parent=5 // pred_fallthru
        _
      %p292 = scmp.le.s32.totalorder 1, %s20
      %p293 = scmp.lt.s32.totalorder %s20, 3
      %p294 = pnand %p292, %p293
      %p295 = pneg %p294
      // Predicated region
      $region53: #{tpu_custom_call.1} parent=5 // pred_check
        _
      $region54: #{tpu_custom_call.1} parent=5 // pred_check_branch
        %297 = sbr.rel (%p294) target = $region56
      $region55: #{tpu_custom_call.1} parent=5 // pred_region
        %s298 = ssub.s32 %s20, 1
        %s299 = smul.u32 4, %s25
        %p300 = scmp.lt.s32.totalorder %s299, 7
        %s301 = scalar_select %p300, %s299, 7
        %s302 = smul.addr %s301, 2
        %s303 = scalar_lea.vmem %s0, %s302
        %p304 = pneg %p46
        %p305 = pneg %p43
        %p306 = pneg %p67
        %p307 = pneg %p64
        %p308 = pneg %p88
        %p309 = pneg %p85
        %p310 = pneg %p109
        %p311 = pneg %p106
        %p312 = pneg %p130
        %p313 = pneg %p127
        %p314 = pneg %p151
        %p315 = pneg %p148
        %p316 = pneg %p172
        %p317 = pneg %p169
        %p318 = pneg %p193
        %p319 = pneg %p190
        %p320 = pneg %p214
        %p321 = pneg %p211
        %p322 = pneg %p240
        %p323 = pneg %p237
        %s324 = sand.u32 %s227, 1
        %s325 = scalar_lea.sflag [#allocation4], %s324
        %s326 = sand.u32 %s227, 1
        %s327 = smul.addr %s326, 4
        %s328 = scalar_lea.vmem [#allocation3], %s327
        %s329 = smul.u32 4, %s25
        %p330 = scmp.lt.s32.totalorder %s329, 7
        %s331 = scalar_select %p330, %s329, 7
        %s332 = smul.addr %s331, 2
        %s333 = scalar_lea.vmem %s0, %s332
        %s334 = smul.u32 4, %s25
        %s335 = smul.u32 4, %s25
        %v337 = vld [vmem:[%s333] ss:$2 sm:$0xf]
        %s338 = scalar_lea.vmem %s333, 1
        %v339 = vld [vmem:[%s338] ss:$2 sm:$0xf]
        %v340 = vld [vmem:[%s1] sm:$0xff]
        %v341 = vld [vmem:[%s1 + $0x8] sm:$0xff]
        %v342 = vld [vmem:[%s1 + $0x10] sm:$0xff]
        %v343 = vld [vmem:[%s1 + $0x18] sm:$0xff]
        %345 = vset.pattern.permute.xlu0 0
        %346 = vperm.xlu0 %345, %v340
        %v347 = vpop.permute.xlu0 %346
        %350 = vset.pattern.permute.xlu0 0
        %351 = vperm.xlu0 %350, %v341
        %v352 = vpop.permute.xlu0 %351
        %355 = vset.pattern.permute.xlu0 0
        %356 = vperm.xlu0 %355, %v342
        %v357 = vpop.permute.xlu0 %356
        %360 = vset.pattern.permute.xlu0 0
        %361 = vperm.xlu0 %360, %v343
        %v362 = vpop.permute.xlu0 %361
        %v365 = vlaneseq
        %v366 = vshrl.u32 %v365, 7
        %v367 = vsub.s32 0, %v366
        %v368 = vrot.slane %v337, %v367
        %v369 = vlaneseq
        %v370 = vshrl.u32 %v369, 7
        %v371 = vsub.s32 1, %v370
        %v372 = vrot.slane %v337, %v371
        %v373 = vlaneseq
        %v374 = vshrl.u32 %v373, 7
        %v375 = vsub.s32 2, %v374
        %v376 = vrot.slane %v337, %v375
        %v377 = vlaneseq
        %v378 = vshrl.u32 %v377, 7
        %v379 = vsub.s32 3, %v378
        %v380 = vrot.slane %v337, %v379
        %v385 = vmul.f32 %v347, %v368
        %v386 = vmul.f32 %v347, %v372
        %v387 = vmul.f32 %v347, %v376
        %v388 = vmul.f32 %v347, %v380
        %v389 = vmul.f32 %v352, %v368
        %v390 = vmul.f32 %v352, %v372
        %v391 = vmul.f32 %v352, %v376
        %v392 = vmul.f32 %v352, %v380
        %v393 = vmul.f32 %v357, %v368
        %v394 = vmul.f32 %v357, %v372
        %v395 = vmul.f32 %v357, %v376
        %v396 = vmul.f32 %v357, %v380
        %v397 = vmul.f32 %v362, %v368
        %v398 = vmul.f32 %v362, %v372
        %v399 = vmul.f32 %v362, %v376
        %v400 = vmul.f32 %v362, %v380
        %401 = vset.pattern.permute.xlu0 1
        %402 = vperm.xlu0 %401, %v340
        %v403 = vpop.permute.xlu0 %402
        %405 = vset.pattern.permute.xlu0 1
        %406 = vperm.xlu0 %405, %v341
        %v407 = vpop.permute.xlu0 %406
        %409 = vset.pattern.permute.xlu0 1
        %410 = vperm.xlu0 %409, %v342
        %v411 = vpop.permute.xlu0 %410
        %413 = vset.pattern.permute.xlu0 1
        %414 = vperm.xlu0 %413, %v343
        %v415 = vpop.permute.xlu0 %414
        %v418 = vlaneseq
        %v419 = vshrl.u32 %v418, 7
        %v420 = vsub.s32 0, %v419
        %v421 = vrot.slane %v339, %v420
        %v422 = vlaneseq
        %v423 = vshrl.u32 %v422, 7
        %v424 = vsub.s32 1, %v423
        %v425 = vrot.slane %v339, %v424
        %v426 = vlaneseq
        %v427 = vshrl.u32 %v426, 7
        %v428 = vsub.s32 2, %v427
        %v429 = vrot.slane %v339, %v428
        %v430 = vlaneseq
        %v431 = vshrl.u32 %v430, 7
        %v432 = vsub.s32 3, %v431
        %v433 = vrot.slane %v339, %v432
        %v438 = vmul.f32 %v403, %v421
        %v439 = vmul.f32 %v403, %v425
        %v440 = vmul.f32 %v403, %v429
        %v441 = vmul.f32 %v403, %v433
        %v442 = vmul.f32 %v407, %v421
        %v443 = vmul.f32 %v407, %v425
        %v444 = vmul.f32 %v407, %v429
        %v445 = vmul.f32 %v407, %v433
        %v446 = vmul.f32 %v411, %v421
        %v447 = vmul.f32 %v411, %v425
        %v448 = vmul.f32 %v411, %v429
        %v449 = vmul.f32 %v411, %v433
        %v450 = vmul.f32 %v415, %v421
        %v451 = vmul.f32 %v415, %v425
        %v452 = vmul.f32 %v415, %v429
        %v453 = vmul.f32 %v415, %v433
        %v454 = vadd.f32 %v385, %v438
        %v455 = vadd.f32 %v386, %v439
        %v456 = vadd.f32 %v387, %v440
        %v457 = vadd.f32 %v388, %v441
        %v458 = vadd.f32 %v389, %v442
        %v459 = vadd.f32 %v390, %v443
        %v460 = vadd.f32 %v391, %v444
        %v461 = vadd.f32 %v392, %v445
        %v462 = vadd.f32 %v393, %v446
        %v463 = vadd.f32 %v394, %v447
        %v464 = vadd.f32 %v395, %v448
        %v465 = vadd.f32 %v396, %v449
        %v466 = vadd.f32 %v397, %v450
        %v467 = vadd.f32 %v398, %v451
        %v468 = vadd.f32 %v399, %v452
        %v469 = vadd.f32 %v400, %v453
        %v470 = vld [vmem:[%s2] sm:$0xff]
        %v471 = vld [vmem:[%s2 + $0x8] sm:$0xff]
        %v472 = vld [vmem:[%s2 + $0x10] sm:$0xff]
        %v473 = vld [vmem:[%s2 + $0x18] sm:$0xff]
        %475 = vset.pattern.permute.xlu0 0
        %476 = vperm.xlu0 %475, %v470
        %v477 = vpop.permute.xlu0 %476
        %480 = vset.pattern.permute.xlu0 0
        %481 = vperm.xlu0 %480, %v471
        %v482 = vpop.permute.xlu0 %481
        %485 = vset.pattern.permute.xlu0 0
        %486 = vperm.xlu0 %485, %v472
        %v487 = vpop.permute.xlu0 %486
        %490 = vset.pattern.permute.xlu0 0
        %491 = vperm.xlu0 %490, %v473
        %v492 = vpop.permute.xlu0 %491
        %v494 = vadd.f32 %v454, %v477
        %v495 = vadd.f32 %v455, %v477
        %v496 = vadd.f32 %v456, %v477
        %v497 = vadd.f32 %v457, %v477
        %v498 = vadd.f32 %v458, %v482
        %v499 = vadd.f32 %v459, %v482
        %v500 = vadd.f32 %v460, %v482
        %v501 = vadd.f32 %v461, %v482
        %v502 = vadd.f32 %v462, %v487
        %v503 = vadd.f32 %v463, %v487
        %v504 = vadd.f32 %v464, %v487
        %v505 = vadd.f32 %v465, %v487
        %v506 = vadd.f32 %v466, %v492
        %v507 = vadd.f32 %v467, %v492
        %v508 = vadd.f32 %v468, %v492
        %v509 = vadd.f32 %v469, %v492
        %v510 = vld [vmem:[%s3] sm:$0xf]
        %v511 = vld [vmem:[%s3 + $0x4] sm:$0xf]
        %v512 = vld [vmem:[%s3 + $0x8] sm:$0xf]
        %v513 = vld [vmem:[%s3 + $0xc] sm:$0xf]
        %v514 = vpack.c.bf16 %v498, %v494
        %v515 = vpack.c.bf16 %v499, %v495
        %v516 = vpack.c.bf16 %v500, %v496
        %v517 = vpack.c.bf16 %v501, %v497
        %v518 = vpack.c.bf16 %v506, %v502
        %v519 = vpack.c.bf16 %v507, %v503
        %v520 = vpack.c.bf16 %v508, %v504
        %v521 = vpack.c.bf16 %v509, %v505
        %v522 = vld [vmem:[%s4] sm:$0xff]
        %v523 = vld [vmem:[%s4 + $0x8] sm:$0xff]
        %v524 = vld [vmem:[%s4 + $0x10] sm:$0xff]
        %v525 = vld [vmem:[%s4 + $0x18] sm:$0xff]
        %527 = vset.pattern.permute.xlu0 0
        %528 = vperm.xlu0 %527, %v522
        %v529 = vpop.permute.xlu0 %528
        %532 = vset.pattern.permute.xlu0 0
        %533 = vperm.xlu0 %532, %v523
        %v534 = vpop.permute.xlu0 %533
        %537 = vset.pattern.permute.xlu0 0
        %538 = vperm.xlu0 %537, %v524
        %v539 = vpop.permute.xlu0 %538
        %542 = vset.pattern.permute.xlu0 0
        %543 = vperm.xlu0 %542, %v525
        %v544 = vpop.permute.xlu0 %543
        %v550 = vunpack.c.l.b16 %v510
        %v551 = vunpack.c.l.b16 %v511
        %v552 = vunpack.c.l.b16 %v512
        %v553 = vunpack.c.l.b16 %v513
        %v554 = vpack.c.b16 %v551, %v550
        %v555 = vpack.c.b16 %v553, %v552
        %vm556 = vcmask 261120
        %v558 = vsel %vm556, %v554, 0
        %v561 = vsel %vm556, %v555, 0
        %563 = vmatprep.subr.bf16.mxu0 0
        %564 = vmatpush1.bf16.msra.mxu0 0
        %565 = vmatprep.subr.bf16.mxu0 0
        %566 = vmatpush1.bf16.msra.mxu0 0
        %567 = vmatprep.subr.bf16.mxu0 0
        %568 = vmatpush1.bf16.msra.mxu0 0
        %569 = vmatprep.subr.bf16.mxu0 0
        %570 = vmatpush1.bf16.msra.mxu0 0
        %571 = vmatprep.subr.bf16.mxu0 0
        %572 = vmatpush1.bf16.msra.mxu0 0
        %573 = vmatprep.subr.bf16.mxu0 0
        %574 = vmatpush1.bf16.msra.mxu0 0
        %575 = vmatprep.subr.bf16.mxu0 %v519
        %576 = vmatpush1.bf16.msra.mxu0 %v518
        %577 = vmatprep.subr.bf16.mxu0 %v515
        %578 = vmatpush1.bf16.msra.mxu0 %v514
        %579 = vmatprep.subr.bf16.mxu0 0
        %580 = vmatpush2.bf16.msra.mxu0 0
        %581 = vmatprep.subr.bf16.mxu0 0
        %582 = vmatpush2.bf16.msra.mxu0 0
        %583 = vmatprep.subr.bf16.mxu0 0
        %584 = vmatpush2.bf16.msra.mxu0 0
        %585 = vmatprep.subr.bf16.mxu0 0
        %586 = vmatpush2.bf16.msra.mxu0 0
        %587 = vmatprep.subr.bf16.mxu0 0
        %588 = vmatpush2.bf16.msra.mxu0 0
        %589 = vmatprep.subr.bf16.mxu0 0
        %590 = vmatpush2.bf16.msra.mxu0 0
        %591 = vmatprep.subr.bf16.mxu0 0
        %592 = vmatpush2.bf16.msra.mxu0 0
        %593 = vmatprep.subr.bf16.mxu0 0
        %594 = vmatpush2.bf16.msra.mxu0 0
        %595 = vmatprep.mubr.bf16.mxu0 0
        %596 = vmatmul.mubr.bf16.gmra.mxu0 %v558
        %v597 = vpop.f32.mrf.mxu0
        %v598 = vadd.f32 %v529, %v597
        %v599 = vpop.f32.mrf.mxu0
        %v600 = vadd.f32 %v529, %v599
        %v601 = vpop.f32.mrf.mxu0
        %v602 = vadd.f32 %v534, %v601
        %v603 = vpop.f32.mrf.mxu0
        %v604 = vadd.f32 %v534, %v603
        %605 = vmatprep.mubr.bf16.mxu0 0
        %606 = vmatmul.mubr.bf16.gmra.mxu0 %v561
        %v607 = vpop.f32.mrf.mxu0
        %v608 = vadd.f32 %v539, %v607
        %v609 = vpop.f32.mrf.mxu0
        %v610 = vadd.f32 %v539, %v609
        %v611 = vpop.f32.mrf.mxu0
        %v612 = vadd.f32 %v544, %v611
        %v613 = vpop.f32.mrf.mxu0
        %v614 = vadd.f32 %v544, %v613
        %615 = vdwg.mxu0
        %616 = vmatprep.subr.bf16.mxu0 0
        %617 = vmatpush1.bf16.msra.mxu0 0
        %618 = vmatprep.subr.bf16.mxu0 0
        %619 = vmatpush1.bf16.msra.mxu0 0
        %620 = vmatprep.subr.bf16.mxu0 0
        %621 = vmatpush1.bf16.msra.mxu0 0
        %622 = vmatprep.subr.bf16.mxu0 0
        %623 = vmatpush1.bf16.msra.mxu0 0
        %624 = vmatprep.subr.bf16.mxu0 0
        %625 = vmatpush1.bf16.msra.mxu0 0
        %626 = vmatprep.subr.bf16.mxu0 0
        %627 = vmatpush1.bf16.msra.mxu0 0
        %628 = vmatprep.subr.bf16.mxu0 %v521
        %629 = vmatpush1.bf16.msra.mxu0 %v520
        %630 = vmatprep.subr.bf16.mxu0 %v517
        %631 = vmatpush1.bf16.msra.mxu0 %v516
        %632 = vmatprep.subr.bf16.mxu0 0
        %633 = vmatpush2.bf16.msra.mxu0 0
        %634 = vmatprep.subr.bf16.mxu0 0
        %635 = vmatpush2.bf16.msra.mxu0 0
        %636 = vmatprep.subr.bf16.mxu0 0
        %637 = vmatpush2.bf16.msra.mxu0 0
        %638 = vmatprep.subr.bf16.mxu0 0
        %639 = vmatpush2.bf16.msra.mxu0 0
        %640 = vmatprep.subr.bf16.mxu0 0
        %641 = vmatpush2.bf16.msra.mxu0 0
        %642 = vmatprep.subr.bf16.mxu0 0
        %643 = vmatpush2.bf16.msra.mxu0 0
        %644 = vmatprep.subr.bf16.mxu0 0
        %645 = vmatpush2.bf16.msra.mxu0 0
        %646 = vmatprep.subr.bf16.mxu0 0
        %647 = vmatpush2.bf16.msra.mxu0 0
        %648 = vmatprep.mubr.bf16.mxu0 0
        %649 = vmatmul.mubr.bf16.gmra.mxu0 %v558
        %v650 = vpop.f32.mrf.mxu0
        %v651 = vadd.f32 %v529, %v650
        %v652 = vpop.f32.mrf.mxu0
        %v653 = vadd.f32 %v529, %v652
        %v654 = vpop.f32.mrf.mxu0
        %v655 = vadd.f32 %v534, %v654
        %v656 = vpop.f32.mrf.mxu0
        %v657 = vadd.f32 %v534, %v656
        %658 = vmatprep.mubr.bf16.mxu0 0
        %659 = vmatmul.mubr.bf16.gmra.mxu0 %v561
        %v660 = vpop.f32.mrf.mxu0
        %v661 = vadd.f32 %v539, %v660
        %v662 = vpop.f32.mrf.mxu0
        %v663 = vadd.f32 %v539, %v662
        %v664 = vpop.f32.mrf.mxu0
        %v665 = vadd.f32 %v544, %v664
        %v666 = vpop.f32.mrf.mxu0
        %v667 = vadd.f32 %v544, %v666
        %668 = vdwg.mxu0
        %v669 = vtanh.pop %v598
        %v670 = vtanh.pop %v600
        %v671 = vtanh.pop %v651
        %v672 = vtanh.pop %v653
        %v673 = vtanh.pop %v602
        %v674 = vtanh.pop %v604
        %v675 = vtanh.pop %v655
        %v676 = vtanh.pop %v657
        %v677 = vtanh.pop %v608
        %v678 = vtanh.pop %v610
        %v679 = vtanh.pop %v661
        %v680 = vtanh.pop %v663
        %v681 = vtanh.pop %v612
        %v682 = vtanh.pop %v614
        %v683 = vtanh.pop %v665
        %v684 = vtanh.pop %v667
        %s685 = scalar_lea.vmem %s3, 16
        %v686 = vld [vmem:[%s685] sm:$0xf]
        %v687 = vld [vmem:[%s685 + $0x4] sm:$0xf]
        %v688 = vld [vmem:[%s685 + $0x8] sm:$0xf]
        %v689 = vld [vmem:[%s685 + $0xc] sm:$0xf]
        %v690 = vpack.c.bf16 %v673, %v669
        %v691 = vpack.c.bf16 %v674, %v670
        %v692 = vpack.c.bf16 %v675, %v671
        %v693 = vpack.c.bf16 %v676, %v672
        %v694 = vpack.c.bf16 %v681, %v677
        %v695 = vpack.c.bf16 %v682, %v678
        %v696 = vpack.c.bf16 %v683, %v679
        %v697 = vpack.c.bf16 %v684, %v680
        %s698 = scalar_lea.vmem %s4, 32
        %v699 = vld [vmem:[%s698] sm:$0xff]
        %v700 = vld [vmem:[%s698 + $0x8] sm:$0xff]
        %v701 = vld [vmem:[%s698 + $0x10] sm:$0xff]
        %v702 = vld [vmem:[%s698 + $0x18] sm:$0xff]
        %704 = vset.pattern.permute.xlu0 0
        %705 = vperm.xlu0 %704, %v699
        %v706 = vpop.permute.xlu0 %705
        %709 = vset.pattern.permute.xlu0 0
        %710 = vperm.xlu0 %709, %v700
        %v711 = vpop.permute.xlu0 %710
        %714 = vset.pattern.permute.xlu0 0
        %715 = vperm.xlu0 %714, %v701
        %v716 = vpop.permute.xlu0 %715
        %719 = vset.pattern.permute.xlu0 0
        %720 = vperm.xlu0 %719, %v702
        %v721 = vpop.permute.xlu0 %720
        %v727 = vunpack.c.l.b16 %v686
        %v728 = vunpack.c.l.b16 %v687
        %v729 = vunpack.c.l.b16 %v688
        %v730 = vunpack.c.l.b16 %v689
        %v731 = vpack.c.b16 %v728, %v727
        %v732 = vpack.c.b16 %v730, %v729
        %v734 = vsel %vm556, %v731, 0
        %v737 = vsel %vm556, %v732, 0
        %739 = vmatprep.subr.bf16.mxu0 0
        %740 = vmatpush1.bf16.msra.mxu0 0
        %741 = vmatprep.subr.bf16.mxu0 0
        %742 = vmatpush1.bf16.msra.mxu0 0
        %743 = vmatprep.subr.bf16.mxu0 0
        %744 = vmatpush1.bf16.msra.mxu0 0
        %745 = vmatprep.subr.bf16.mxu0 0
        %746 = vmatpush1.bf16.msra.mxu0 0
        %747 = vmatprep.subr.bf16.mxu0 0
        %748 = vmatpush1.bf16.msra.mxu0 0
        %749 = vmatprep.subr.bf16.mxu0 0
        %750 = vmatpush1.bf16.msra.mxu0 0
        %751 = vmatprep.subr.bf16.mxu0 %v695
        %752 = vmatpush1.bf16.msra.mxu0 %v694
        %753 = vmatprep.subr.bf16.mxu0 %v691
        %754 = vmatpush1.bf16.msra.mxu0 %v690
        %755 = vmatprep.subr.bf16.mxu0 0
        %756 = vmatpush2.bf16.msra.mxu0 0
        %757 = vmatprep.subr.bf16.mxu0 0
        %758 = vmatpush2.bf16.msra.mxu0 0
        %759 = vmatprep.subr.bf16.mxu0 0
        %760 = vmatpush2.bf16.msra.mxu0 0
        %761 = vmatprep.subr.bf16.mxu0 0
        %762 = vmatpush2.bf16.msra.mxu0 0
        %763 = vmatprep.subr.bf16.mxu0 0
        %764 = vmatpush2.bf16.msra.mxu0 0
        %765 = vmatprep.subr.bf16.mxu0 0
        %766 = vmatpush2.bf16.msra.mxu0 0
        %767 = vmatprep.subr.bf16.mxu0 0
        %768 = vmatpush2.bf16.msra.mxu0 0
        %769 = vmatprep.subr.bf16.mxu0 0
        %770 = vmatpush2.bf16.msra.mxu0 0
        %771 = vmatprep.mubr.bf16.mxu0 0
        %772 = vmatmul.mubr.bf16.gmra.mxu0 %v734
        %v773 = vpop.f32.mrf.mxu0
        %v774 = vadd.f32 %v706, %v773
        %v775 = vpop.f32.mrf.mxu0
        %v776 = vadd.f32 %v706, %v775
        %v777 = vpop.f32.mrf.mxu0
        %v778 = vadd.f32 %v711, %v777
        %v779 = vpop.f32.mrf.mxu0
        %v780 = vadd.f32 %v711, %v779
        %781 = vmatprep.mubr.bf16.mxu0 0
        %782 = vmatmul.mubr.bf16.gmra.mxu0 %v737
        %v783 = vpop.f32.mrf.mxu0
        %v784 = vadd.f32 %v716, %v783
        %v785 = vpop.f32.mrf.mxu0
        %v786 = vadd.f32 %v716, %v785
        %v787 = vpop.f32.mrf.mxu0
        %v788 = vadd.f32 %v721, %v787
        %v789 = vpop.f32.mrf.mxu0
        %v790 = vadd.f32 %v721, %v789
        %791 = vdwg.mxu0
        %792 = vmatprep.subr.bf16.mxu0 0
        %793 = vmatpush1.bf16.msra.mxu0 0
        %794 = vmatprep.subr.bf16.mxu0 0
        %795 = vmatpush1.bf16.msra.mxu0 0
        %796 = vmatprep.subr.bf16.mxu0 0
        %797 = vmatpush1.bf16.msra.mxu0 0
        %798 = vmatprep.subr.bf16.mxu0 0
        %799 = vmatpush1.bf16.msra.mxu0 0
        %800 = vmatprep.subr.bf16.mxu0 0
        %801 = vmatpush1.bf16.msra.mxu0 0
        %802 = vmatprep.subr.bf16.mxu0 0
        %803 = vmatpush1.bf16.msra.mxu0 0
        %804 = vmatprep.subr.bf16.mxu0 %v697
        %805 = vmatpush1.bf16.msra.mxu0 %v696
        %806 = vmatprep.subr.bf16.mxu0 %v693
        %807 = vmatpush1.bf16.msra.mxu0 %v692
        %808 = vmatprep.subr.bf16.mxu0 0
        %809 = vmatpush2.bf16.msra.mxu0 0
        %810 = vmatprep.subr.bf16.mxu0 0
        %811 = vmatpush2.bf16.msra.mxu0 0
        %812 = vmatprep.subr.bf16.mxu0 0
        %813 = vmatpush2.bf16.msra.mxu0 0
        %814 = vmatprep.subr.bf16.mxu0 0
        %815 = vmatpush2.bf16.msra.mxu0 0
        %816 = vmatprep.subr.bf16.mxu0 0
        %817 = vmatpush2.bf16.msra.mxu0 0
        %818 = vmatprep.subr.bf16.mxu0 0
        %819 = vmatpush2.bf16.msra.mxu0 0
        %820 = vmatprep.subr.bf16.mxu0 0
        %821 = vmatpush2.bf16.msra.mxu0 0
        %822 = vmatprep.subr.bf16.mxu0 0
        %823 = vmatpush2.bf16.msra.mxu0 0
        %824 = vmatprep.mubr.bf16.mxu0 0
        %825 = vmatmul.mubr.bf16.gmra.mxu0 %v734
        %v826 = vpop.f32.mrf.mxu0
        %v827 = vadd.f32 %v706, %v826
        %v828 = vpop.f32.mrf.mxu0
        %v829 = vadd.f32 %v706, %v828
        %v830 = vpop.f32.mrf.mxu0
        %v831 = vadd.f32 %v711, %v830
        %v832 = vpop.f32.mrf.mxu0
        %v833 = vadd.f32 %v711, %v832
        %834 = vmatprep.mubr.bf16.mxu0 0
        %835 = vmatmul.mubr.bf16.gmra.mxu0 %v737
        %v836 = vpop.f32.mrf.mxu0
        %v837 = vadd.f32 %v716, %v836
        %v838 = vpop.f32.mrf.mxu0
        %v839 = vadd.f32 %v716, %v838
        %v840 = vpop.f32.mrf.mxu0
        %v841 = vadd.f32 %v721, %v840
        %v842 = vpop.f32.mrf.mxu0
        %v843 = vadd.f32 %v721, %v842
        %844 = vdwg.mxu0
        %v845 = vtanh.pop %v774
        %v846 = vtanh.pop %v776
        %v847 = vtanh.pop %v827
        %v848 = vtanh.pop %v829
        %v849 = vtanh.pop %v778
        %v850 = vtanh.pop %v780
        %v851 = vtanh.pop %v831
        %v852 = vtanh.pop %v833
        %v853 = vtanh.pop %v784
        %v854 = vtanh.pop %v786
        %v855 = vtanh.pop %v837
        %v856 = vtanh.pop %v839
        %v857 = vtanh.pop %v788
        %v858 = vtanh.pop %v790
        %v859 = vtanh.pop %v841
        %v860 = vtanh.pop %v843
        %v861 = vld [vmem:[%s5] sm:$0xf]
        %v862 = vld [vmem:[%s5 + $0x4] sm:$0xf]
        %v863 = vld [vmem:[%s5 + $0x8] sm:$0xf]
        %v864 = vld [vmem:[%s5 + $0xc] sm:$0xf]
        %v865 = vpack.c.bf16 %v849, %v845
        %v866 = vpack.c.bf16 %v850, %v846
        %v867 = vpack.c.bf16 %v851, %v847
        %v868 = vpack.c.bf16 %v852, %v848
        %v869 = vpack.c.bf16 %v857, %v853
        %v870 = vpack.c.bf16 %v858, %v854
        %v871 = vpack.c.bf16 %v859, %v855
        %v872 = vpack.c.bf16 %v860, %v856
        %v873 = vld [vmem:[%s6] sm:$0xff]
        %v874 = vld [vmem:[%s6 + $0x8] sm:$0xff]
        %v875 = vld [vmem:[%s6 + $0x10] sm:$0xff]
        %v876 = vld [vmem:[%s6 + $0x18] sm:$0xff]
        %878 = vset.pattern.permute.xlu0 0
        %879 = vperm.xlu0 %878, %v873
        %v880 = vpop.permute.xlu0 %879
        %883 = vset.pattern.permute.xlu0 0
        %884 = vperm.xlu0 %883, %v874
        %v885 = vpop.permute.xlu0 %884
        %888 = vset.pattern.permute.xlu0 0
        %889 = vperm.xlu0 %888, %v875
        %v890 = vpop.permute.xlu0 %889
        %893 = vset.pattern.permute.xlu0 0
        %894 = vperm.xlu0 %893, %v876
        %v895 = vpop.permute.xlu0 %894
        %v901 = vunpack.c.l.b16 %v861
        %v902 = vunpack.c.l.b16 %v862
        %v903 = vunpack.c.l.b16 %v863
        %v904 = vunpack.c.l.b16 %v864
        %v905 = vpack.c.b16 %v902, %v901
        %v906 = vpack.c.b16 %v904, %v903
        %v908 = vsel %vm556, %v905, 0
        %v911 = vsel %vm556, %v906, 0
        %913 = vmatprep.subr.bf16.mxu0 0
        %914 = vmatpush1.bf16.msra.mxu0 0
        %915 = vmatprep.subr.bf16.mxu0 0
        %916 = vmatpush1.bf16.msra.mxu0 0
        %917 = vmatprep.subr.bf16.mxu0 0
        %918 = vmatpush1.bf16.msra.mxu0 0
        %919 = vmatprep.subr.bf16.mxu0 0
        %920 = vmatpush1.bf16.msra.mxu0 0
        %921 = vmatprep.subr.bf16.mxu0 0
        %922 = vmatpush1.bf16.msra.mxu0 0
        %923 = vmatprep.subr.bf16.mxu0 0
        %924 = vmatpush1.bf16.msra.mxu0 0
        %925 = vmatprep.subr.bf16.mxu0 %v870
        %926 = vmatpush1.bf16.msra.mxu0 %v869
        %927 = vmatprep.subr.bf16.mxu0 %v866
        %928 = vmatpush1.bf16.msra.mxu0 %v865
        %929 = vmatprep.subr.bf16.mxu0 0
        %930 = vmatpush2.bf16.msra.mxu0 0
        %931 = vmatprep.subr.bf16.mxu0 0
        %932 = vmatpush2.bf16.msra.mxu0 0
        %933 = vmatprep.subr.bf16.mxu0 0
        %934 = vmatpush2.bf16.msra.mxu0 0
        %935 = vmatprep.subr.bf16.mxu0 0
        %936 = vmatpush2.bf16.msra.mxu0 0
        %937 = vmatprep.subr.bf16.mxu0 0
        %938 = vmatpush2.bf16.msra.mxu0 0
        %939 = vmatprep.subr.bf16.mxu0 0
        %940 = vmatpush2.bf16.msra.mxu0 0
        %941 = vmatprep.subr.bf16.mxu0 0
        %942 = vmatpush2.bf16.msra.mxu0 0
        %943 = vmatprep.subr.bf16.mxu0 0
        %944 = vmatpush2.bf16.msra.mxu0 0
        %945 = vmatprep.mubr.bf16.mxu0 0
        %946 = vmatmul.mubr.bf16.gmra.mxu0 %v908
        %v947 = vpop.f32.mrf.mxu0
        %v948 = vadd.f32 %v880, %v947
        %v949 = vpop.f32.mrf.mxu0
        %v950 = vadd.f32 %v880, %v949
        %v951 = vpop.f32.mrf.mxu0
        %v952 = vadd.f32 %v885, %v951
        %v953 = vpop.f32.mrf.mxu0
        %v954 = vadd.f32 %v885, %v953
        %955 = vmatprep.mubr.bf16.mxu0 0
        %956 = vmatmul.mubr.bf16.gmra.mxu0 %v911
        %v957 = vpop.f32.mrf.mxu0
        %v958 = vadd.f32 %v890, %v957
        %v959 = vpop.f32.mrf.mxu0
        %v960 = vadd.f32 %v890, %v959
        %v961 = vpop.f32.mrf.mxu0
        %v962 = vadd.f32 %v895, %v961
        %v963 = vpop.f32.mrf.mxu0
        %v964 = vadd.f32 %v895, %v963
        %965 = vdwg.mxu0
        %966 = vmatprep.subr.bf16.mxu0 0
        %967 = vmatpush1.bf16.msra.mxu0 0
        %968 = vmatprep.subr.bf16.mxu0 0
        %969 = vmatpush1.bf16.msra.mxu0 0
        %970 = vmatprep.subr.bf16.mxu0 0
        %971 = vmatpush1.bf16.msra.mxu0 0
        %972 = vmatprep.subr.bf16.mxu0 0
        %973 = vmatpush1.bf16.msra.mxu0 0
        %974 = vmatprep.subr.bf16.mxu0 0
        %975 = vmatpush1.bf16.msra.mxu0 0
        %976 = vmatprep.subr.bf16.mxu0 0
        %977 = vmatpush1.bf16.msra.mxu0 0
        %978 = vmatprep.subr.bf16.mxu0 %v872
        %979 = vmatpush1.bf16.msra.mxu0 %v871
        %980 = vmatprep.subr.bf16.mxu0 %v868
        %981 = vmatpush1.bf16.msra.mxu0 %v867
        %982 = vmatprep.subr.bf16.mxu0 0
        %983 = vmatpush2.bf16.msra.mxu0 0
        %984 = vmatprep.subr.bf16.mxu0 0
        %985 = vmatpush2.bf16.msra.mxu0 0
        %986 = vmatprep.subr.bf16.mxu0 0
        %987 = vmatpush2.bf16.msra.mxu0 0
        %988 = vmatprep.subr.bf16.mxu0 0
        %989 = vmatpush2.bf16.msra.mxu0 0
        %990 = vmatprep.subr.bf16.mxu0 0
        %991 = vmatpush2.bf16.msra.mxu0 0
        %992 = vmatprep.subr.bf16.mxu0 0
        %993 = vmatpush2.bf16.msra.mxu0 0
        %994 = vmatprep.subr.bf16.mxu0 0
        %995 = vmatpush2.bf16.msra.mxu0 0
        %996 = vmatprep.subr.bf16.mxu0 0
        %997 = vmatpush2.bf16.msra.mxu0 0
        %998 = vmatprep.mubr.bf16.mxu0 0
        %999 = vmatmul.mubr.bf16.gmra.mxu0 %v908
        %v1000 = vpop.f32.mrf.mxu0
        %v1001 = vadd.f32 %v880, %v1000
        %v1002 = vpop.f32.mrf.mxu0
        %v1003 = vadd.f32 %v880, %v1002
        %v1004 = vpop.f32.mrf.mxu0
        %v1005 = vadd.f32 %v885, %v1004
        %v1006 = vpop.f32.mrf.mxu0
        %v1007 = vadd.f32 %v885, %v1006
        %1008 = vmatprep.mubr.bf16.mxu0 0
        %1009 = vmatmul.mubr.bf16.gmra.mxu0 %v911
        %v1010 = vpop.f32.mrf.mxu0
        %v1011 = vadd.f32 %v890, %v1010
        %v1012 = vpop.f32.mrf.mxu0
        %v1013 = vadd.f32 %v890, %v1012
        %v1014 = vpop.f32.mrf.mxu0
        %v1015 = vadd.f32 %v895, %v1014
        %v1016 = vpop.f32.mrf.mxu0
        %v1017 = vadd.f32 %v895, %v1016
        %1018 = vdwg.mxu0
        %v1019 = vld [vmem:[%s7] sm:$0x1]
        %v1020 = vpack.c.bf16 %v952, %v948
        %v1021 = vpack.c.bf16 %v954, %v950
        %v1022 = vpack.c.bf16 %v1005, %v1001
        %v1023 = vpack.c.bf16 %v1007, %v1003
        %v1024 = vpack.c.bf16 %v962, %v958
        %v1025 = vpack.c.bf16 %v964, %v960
        %v1026 = vpack.c.bf16 %v1015, %v1011
        %v1027 = vpack.c.bf16 %v1017, %v1013
        %v1028 = vld [vmem:[#allocation2] sm:$0x1]
        %1030 = vset.pattern.permute.xlu0 0
        %1031 = vperm.xlu0 %1030, %v1028
        %v1032 = vpop.permute.xlu0 %1031
        %v1034 = vlaneseq
        %v1035 = vshrl.u32 %v1034, 7
        %v1036 = vsub.s32 0, %v1035
        %v1037 = vrot.slane %v1032, %v1036
        %v1039 = vsel %vm556, %v1019, 0
        %1041 = vmatprep.subr.bf16.mxu0 0
        %1042 = vmatpush1.bf16.msra.mxu0 0
        %1043 = vmatprep.subr.bf16.mxu0 0
        %1044 = vmatpush1.bf16.msra.mxu0 0
        %1045 = vmatprep.subr.bf16.mxu0 0
        %1046 = vmatpush1.bf16.msra.mxu0 0
        %1047 = vmatprep.subr.bf16.mxu0 0
        %1048 = vmatpush1.bf16.msra.mxu0 0
        %1049 = vmatprep.subr.bf16.mxu0 0
        %1050 = vmatpush1.bf16.msra.mxu0 0
        %1051 = vmatprep.subr.bf16.mxu0 0
        %1052 = vmatpush1.bf16.msra.mxu0 0
        %1053 = vmatprep.subr.bf16.mxu0 %v1025
        %1054 = vmatpush1.bf16.msra.mxu0 %v1024
        %1055 = vmatprep.subr.bf16.mxu0 %v1021
        %1056 = vmatpush1.bf16.msra.mxu0 %v1020
        %1057 = vmatprep.subr.bf16.mxu0 0
        %1058 = vmatpush2.bf16.msra.mxu0 0
        %1059 = vmatprep.subr.bf16.mxu0 0
        %1060 = vmatpush2.bf16.msra.mxu0 0
        %1061 = vmatprep.subr.bf16.mxu0 0
        %1062 = vmatpush2.bf16.msra.mxu0 0
        %1063 = vmatprep.subr.bf16.mxu0 0
        %1064 = vmatpush2.bf16.msra.mxu0 0
        %1065 = vmatprep.subr.bf16.mxu0 0
        %1066 = vmatpush2.bf16.msra.mxu0 0
        %1067 = vmatprep.subr.bf16.mxu0 0
        %1068 = vmatpush2.bf16.msra.mxu0 0
        %1069 = vmatprep.subr.bf16.mxu0 0
        %1070 = vmatpush2.bf16.msra.mxu0 0
        %1071 = vmatprep.subr.bf16.mxu0 0
        %1072 = vmatpush2.bf16.msra.mxu0 0
        %1073 = vmatprep.mubr.bf16.mxu0 0
        %1074 = vmatmul.mubr.bf16.gmra.mxu0 %v1039
        %v1075 = vpop.f32.mrf.mxu0
        %v1076 = vadd.f32 %v1037, %v1075
        %v1077 = vpop.f32.mrf.mxu0
        %v1078 = vadd.f32 %v1037, %v1077
        %v1079 = vpop.f32.mrf.mxu0
        %v1080 = vpop.f32.mrf.mxu0
        %1081 = vdwg.mxu0
        %1082 = vmatprep.subr.bf16.mxu0 0
        %1083 = vmatpush1.bf16.msra.mxu0 0
        %1084 = vmatprep.subr.bf16.mxu0 0
        %1085 = vmatpush1.bf16.msra.mxu0 0
        %1086 = vmatprep.subr.bf16.mxu0 0
        %1087 = vmatpush1.bf16.msra.mxu0 0
        %1088 = vmatprep.subr.bf16.mxu0 0
        %1089 = vmatpush1.bf16.msra.mxu0 0
        %1090 = vmatprep.subr.bf16.mxu0 0
        %1091 = vmatpush1.bf16.msra.mxu0 0
        %1092 = vmatprep.subr.bf16.mxu0 0
        %1093 = vmatpush1.bf16.msra.mxu0 0
        %1094 = vmatprep.subr.bf16.mxu0 %v1027
        %1095 = vmatpush1.bf16.msra.mxu0 %v1026
        %1096 = vmatprep.subr.bf16.mxu0 %v1023
        %1097 = vmatpush1.bf16.msra.mxu0 %v1022
        %1098 = vmatprep.subr.bf16.mxu0 0
        %1099 = vmatpush2.bf16.msra.mxu0 0
        %1100 = vmatprep.subr.bf16.mxu0 0
        %1101 = vmatpush2.bf16.msra.mxu0 0
        %1102 = vmatprep.subr.bf16.mxu0 0
        %1103 = vmatpush2.bf16.msra.mxu0 0
        %1104 = vmatprep.subr.bf16.mxu0 0
        %1105 = vmatpush2.bf16.msra.mxu0 0
        %1106 = vmatprep.subr.bf16.mxu0 0
        %1107 = vmatpush2.bf16.msra.mxu0 0
        %1108 = vmatprep.subr.bf16.mxu0 0
        %1109 = vmatpush2.bf16.msra.mxu0 0
        %1110 = vmatprep.subr.bf16.mxu0 0
        %1111 = vmatpush2.bf16.msra.mxu0 0
        %1112 = vmatprep.subr.bf16.mxu0 0
        %1113 = vmatpush2.bf16.msra.mxu0 0
        %1114 = vmatprep.mubr.bf16.mxu0 0
        %1115 = vmatmul.mubr.bf16.gmra.mxu0 %v1039
        %v1116 = vpop.f32.mrf.mxu0
        %v1117 = vadd.f32 %v1037, %v1116
        %v1118 = vpop.f32.mrf.mxu0
        %v1119 = vadd.f32 %v1037, %v1118
        %v1120 = vpop.f32.mrf.mxu0
        %v1121 = vpop.f32.mrf.mxu0
        %1122 = vdwg.mxu0
        %v1127 = vcombine.low %v1076, %v1078
        %v1128 = vcombine.low %v1117, %v1119
        %v1130 = vunpack.c.l.s4 1966171168
        %v1131 = vunpack.c.0.s8 %v1130
        %v1132 = vlaneseq
        %v1133 = vshrl.u32 %v1132, 7
        %v1134 = vsub.s32 %v1131, %v1133
        %v1135 = vrot.slane %v1127, %v1134
        %v1137 = vunpack.c.l.s4 1966171168
        %v1138 = vunpack.c.0.s8 %v1137
        %v1139 = vlaneseq
        %v1140 = vshrl.u32 %v1139, 7
        %v1141 = vsub.s32 %v1138, %v1140
        %v1142 = vrot.slane %v1128, %v1141
        %v1143 = vcombine.low %v1135, %v1142
        %v1145 = vunpack.c.l.s4 1966171168
        %v1146 = vunpack.c.0.s8 %v1145
        %v1147 = vlaneseq
        %v1148 = vshrl.u32 %v1147, 7
        %v1149 = vsub.s32 %v1146, %v1148
        %v1150 = vrot.slane %v1143, %v1149
        %v1152 = vlaneseq
        %vm1153 = vcmp.ge.s32.totalorder %v1152, 0
        %vm1154 = vcmp.lt.s32.totalorder %v1152, 512
        %vm1155 = vmand %vm1153, %vm1154
        %1156 = vst.msk [vmem:[%s328] sm:$0xf] %vm1155, %v1150
        %s1157 = sand.u32 %s227, 1
        %s1158 = scalar_lea.sflag [#allocation4], %s1157
        %s1159 = sand.u32 %s227, 1
        %s1160 = smul.addr %s1159, 4
        %s1161 = scalar_lea.vmem [#allocation3], %s1160
        // Predicated region
        $region57: #{tpu_custom_call.1} parent=55 // pred_check
          %p1162 = pneg %p237
        $region58: #{tpu_custom_call.1} parent=55 // pred_check_branch
          %1164 = sbr.rel (%p1162) target = $region60
        $region59: #{tpu_custom_call.1} parent=55 // pred_region
          %s1165 = smul.u32 4, %s25
          %s1167 = ssub.s32 64, 64
          %1168 = vsyncadd %s1158, %s1167
          %s1169 = smul.addr %s1165, 16
          %s1170 = scalar_lea.hbm %s9, %s1169
          %s1172 = sshll.u32 %s1161, 4
          %s1173 = int_to_ptr.vmem [resolvable:$true] %s1172
          %1175 = dma.vmem_to_hbm [thread:$0]  %s1173, 64, %s1170, %s1158
        $region60: #{tpu_custom_call.1} parent=55 // pred_fallthru
          _
      $region56: #{tpu_custom_call.1} parent=5 // pred_fallthru
        _
      %p1176 = scmp.le.s32.totalorder 2, %s20
      // Predicated region
      $region61: #{tpu_custom_call.1} parent=5 // pred_check
        %p1177 = pneg %p1176
      $region62: #{tpu_custom_call.1} parent=5 // pred_check_branch
        %1179 = sbr.rel (%p1177) target = $region64
      $region63: #{tpu_custom_call.1} parent=5 // pred_region
        %s1180 = ssub.s32 %s20, 2
        // Predicated region
        $region65: #{tpu_custom_call.1} parent=63 // pred_check
          %p1181 = pneg %p243
        $region66: #{tpu_custom_call.1} parent=63 // pred_check_branch
          %1183 = sbr.rel (%p1181) target = $region68
        $region67: #{tpu_custom_call.1} parent=63 // pred_region
          %s1184 = sand.u32 %s228, 1
          %s1185 = scalar_lea.sflag [#allocation4], %s1184
          %s1186 = sand.u32 %s228, 1
          %s1187 = smul.addr %s1186, 4
          %s1188 = scalar_lea.vmem [#allocation3], %s1187
          %1189 = dma.done %s1185, 64
        $region68: #{tpu_custom_call.1} parent=63 // pred_fallthru
          _
      $region64: #{tpu_custom_call.1} parent=5 // pred_fallthru
        _
    $region6: #{tpu_custom_call.1} parent=1 // loop_footer
      %s24 = sadd.s32 1, %s20
    $region7: #{tpu_custom_call.1} parent=1 // loop_footer_branch
      %19 = sbr.rel target = $region3
    $region8: #{tpu_custom_call.1} parent=1 // loop_exit
      _
    %1190 = vsyncpa [#allocation4], 1
    %s1191 = scalar_lea.sflag [#allocation4], 1
    %1192 = vsyncpa %s1191, 1

</llo_original>
